<compile_context>
chip_gen: v7x
topology: tpu7x:2x2x1
jax: 0.10.0
libtpu: 0.0.40
codegen_flags: <defaults>
</compile_context>

<pallas_src>
import functools

import jax
import jax.numpy as jnp
from jax import lax
from jax.experimental import pallas as pl
from jax.experimental.pallas import tpu as pltpu


def time_embedder_kernel(t_ref, freqs_ref, phase_ref, w1_ref, b1_ref, w2_ref, b2_ref, o_ref,
                         *, inv_dim_m1):
    # ---- positional embedding, lane-dense, single transcendental pass ----
    # freqs_ref already includes time_scaling; phase_ref turns the first half into cos.
    t = t_ref[...]                                           # (TB, 1) f32
    emb = jnp.sin(t * freqs_ref[...] + phase_ref[...])       # (TB, dim) == [cos(p), sin(p)]

    # ---- per-row standardization (unbiased, ddof=1, matches torch .std()) ----
    mean = jnp.mean(emb, axis=-1, keepdims=True)             # (TB, 1)
    centered = emb - mean
    var = jnp.sum(centered * centered, axis=-1, keepdims=True) * inv_dim_m1
    inv_std = lax.rsqrt(var + 1e-12)                         # EUP rsqrt; eps guards degenerate rows
    x = centered * inv_std                                   # (TB, dim) f32

    # ---- MLP: Linear -> SiLU -> Linear (MXU dtype follows weight dtype, f32 accumulate) ----
    h = jnp.dot(x.astype(w1_ref.dtype), w1_ref[...],
                preferred_element_type=jnp.float32) + b1_ref[...]
    h = h * jax.nn.sigmoid(h)                                # SiLU in f32 on VPU/EUP
    out = jnp.dot(h.astype(w2_ref.dtype), w2_ref[...],
                  preferred_element_type=jnp.float32) + b2_ref[...]
    o_ref[...] = out.astype(o_ref.dtype)


def time_embedder(t, freqs_full, phase_off, w1, b1, w2, b2, *, block_b=256):
    """t: (B,). freqs_full/phase_off: (1, dim). w1: (dim, H), b1: (1, H), w2: (H, H), b2: (1, H)."""
    B = t.shape[0]
    dim = freqs_full.shape[1]
    hidden = w1.shape[1]

    TB = min(block_b, B)
    n_tiles = pl.cdiv(B, TB)
    Bp = n_tiles * TB                                        # pad batch to a multiple of the tile

    t2d = t.reshape(B, 1).astype(jnp.float32)
    if Bp != B:
        t2d = jnp.pad(t2d, ((0, Bp - B), (0, 0)))            # padded rows are harmless (sliced off)

    kernel = functools.partial(time_embedder_kernel, inv_dim_m1=1.0 / (dim - 1))

    out = pl.pallas_call(
        kernel,
        out_shape=jax.ShapeDtypeStruct((Bp, hidden), jnp.float32),
        grid_spec=pltpu.PrefetchScalarGridSpec(
            num_scalar_prefetch=0,
            grid=(n_tiles,),                                  # batch tiles
            in_specs=[
                pl.BlockSpec((TB, 1), lambda i: (i, 0)),          # t tile (pipelined)
                pl.BlockSpec((1, dim), lambda i: (0, 0)),         # freqs*scaling (resident)
                pl.BlockSpec((1, dim), lambda i: (0, 0)),         # phase offset   (resident)
                pl.BlockSpec((dim, hidden), lambda i: (0, 0)),    # w1 (resident)
                pl.BlockSpec((1, hidden), lambda i: (0, 0)),      # b1 (resident)
                pl.BlockSpec((hidden, hidden), lambda i: (0, 0)),  # w2 (resident; N-tile at large H)
                pl.BlockSpec((1, hidden), lambda i: (0, 0)),      # b2 (resident)
            ],
            out_specs=pl.BlockSpec((TB, hidden), lambda i: (i, 0)),
        ),
        compiler_params=pltpu.CompilerParams(
            dimension_semantics=("parallel",),                 # megacore-shard the batch axis
            vmem_limit_bytes=64 * 1024 * 1024,
        ),
    )(t2d, freqs_full, phase_off, w1, b1, w2, b2)

    return out[:B] if Bp != B else out


def reference(t, freqs_half, w1, b1, w2, b2, *, time_scaling, dim):
    """Pure-JAX reference mirroring the PyTorch module (cos/sin concat, unbiased std)."""
    t = t.astype(jnp.float32) * time_scaling
    phase = t[:, None] * freqs_half[None, :]
    emb = jnp.concatenate([jnp.cos(phase), jnp.sin(phase)], axis=-1)
    mean = emb.mean(axis=-1, keepdims=True)
    std = jnp.sqrt(jnp.sum((emb - mean) ** 2, axis=-1, keepdims=True) / (dim - 1))
    x = (emb - mean) / std
    h = x @ w1 + b1
    h = h * jax.nn.sigmoid(h)
    return h @ w2 + b2


if __name__ == "__main__":
    # Small, module-consistent shapes.
    B = 8
    dim = 32
    expansion = 4
    hidden = dim * expansion        # 128
    time_scaling = 1000.0
    max_positions = 10000.0

    key = jax.random.PRNGKey(0)
    k_t, k_w1, k_b1, k_w2, k_b2 = jax.random.split(key, 5)

    # diffusion time t in [0, 1)
    t = jax.random.uniform(k_t, (B,), dtype=jnp.float32)

    # PositionalEmbedding(num_channels=dim, endpoint=True) frequencies
    half = dim // 2
    idx = jnp.arange(half, dtype=jnp.float32) / (half - 1)            # endpoint=True
    freqs_half = (1.0 / max_positions) ** idx                         # (half,)

    # Kernel-side constants: time_scaling folded in, cos realized via +pi/2 phase offset.
    freqs_full = (jnp.concatenate([freqs_half, freqs_half]) * time_scaling).reshape(1, dim)
    phase_off = jnp.concatenate(
        [jnp.full((half,), jnp.pi / 2, jnp.float32), jnp.zeros((half,), jnp.float32)]
    ).reshape(1, dim)

    # deterministic Linear params (synthetic init)
    w1 = jax.random.normal(k_w1, (dim, hidden), dtype=jnp.float32) / jnp.sqrt(dim)
    b1 = jax.random.normal(k_b1, (1, hidden), dtype=jnp.float32) * 0.01
    w2 = jax.random.normal(k_w2, (hidden, hidden), dtype=jnp.float32) / jnp.sqrt(hidden)
    b2 = jax.random.normal(k_b2, (1, hidden), dtype=jnp.float32) * 0.01

    ref = reference(t, freqs_half, w1, b1, w2, b2, time_scaling=time_scaling, dim=dim)

    # f32 weights: must match the torch-equivalent reference tightly.
    out = time_embedder(t, freqs_full, phase_off, w1, b1, w2, b2)
    out = jax.block_until_ready(out)
    assert out.shape == (B, hidden)
    assert jnp.allclose(out, ref, atol=1e-4, rtol=1e-4), float(jnp.max(jnp.abs(out - ref)))

    # bf16 weights (MXU fast path): same kernel, looser tolerance.
    out_bf16 = time_embedder(t, freqs_full, phase_off,
                             w1.astype(jnp.bfloat16), b1, w2.astype(jnp.bfloat16), b2)
    out_bf16 = jax.block_until_ready(out_bf16)
    assert jnp.allclose(out_bf16, ref, atol=1e-1, rtol=1e-1), float(jnp.max(jnp.abs(out_bf16 - ref)))

    print("KERNEL_OK")
</pallas_src>

<mosaic_0001>
module attributes {stable_mosaic.version = 11 : i64} {
  func.func @time_embedder_kernel(%arg0: i32, %arg1: memref<8x1xf32, #tpu.memory_space<vmem>>, %arg2: memref<1x32xf32, #tpu.memory_space<vmem>>, %arg3: memref<1x32xf32, #tpu.memory_space<vmem>>, %arg4: memref<32x128xf32, #tpu.memory_space<vmem>>, %arg5: memref<1x128xf32, #tpu.memory_space<vmem>>, %arg6: memref<128x128xf32, #tpu.memory_space<vmem>>, %arg7: memref<1x128xf32, #tpu.memory_space<vmem>>, %arg8: memref<8x128xf32, #tpu.memory_space<vmem>>) attributes {dimension_semantics = [#tpu.dimension_semantics<parallel>], iteration_bounds = array<i64: 1>, scalar_prefetch = 0 : i64, scratch_operands = 0 : i64, tpu.core_type = #tpu.core_type<tc>, window_params = [{transform_indices = @transform_0, window_bounds = array<i64: 8, 1>}, {pipeline_mode = #tpu.pipeline_mode<synchronous>, transform_indices = @transform_1, window_bounds = array<i64: 1, 32>}, {pipeline_mode = #tpu.pipeline_mode<synchronous>, transform_indices = @transform_2, window_bounds = array<i64: 1, 32>}, {pipeline_mode = #tpu.pipeline_mode<synchronous>, transform_indices = @transform_3, window_bounds = array<i64: 32, 128>}, {pipeline_mode = #tpu.pipeline_mode<synchronous>, transform_indices = @transform_4, window_bounds = array<i64: 1, 128>}, {pipeline_mode = #tpu.pipeline_mode<synchronous>, transform_indices = @transform_5, window_bounds = array<i64: 128, 128>}, {pipeline_mode = #tpu.pipeline_mode<synchronous>, transform_indices = @transform_6, window_bounds = array<i64: 1, 128>}, {transform_indices = @transform_7, window_bounds = array<i64: 8, 128>}]} {
    %c0 = arith.constant 0 : index
    %c0_0 = arith.constant 0 : index
    %0 = vector.load %arg1[%c0, %c0_0] : memref<8x1xf32, #tpu.memory_space<vmem>>, vector<8x1xf32>
    %c0_1 = arith.constant 0 : index
    %c0_2 = arith.constant 0 : index
    %1 = vector.load %arg2[%c0_1, %c0_2] : memref<1x32xf32, #tpu.memory_space<vmem>>, vector<1x32xf32>
    %2 = vector.broadcast %0 : vector<8x1xf32> to vector<8x32xf32>
    %3 = vector.broadcast %1 : vector<1x32xf32> to vector<8x32xf32>
    %4 = arith.mulf %2, %3 : vector<8x32xf32>
    %c0_3 = arith.constant 0 : index
    %c0_4 = arith.constant 0 : index
    %5 = vector.load %arg3[%c0_3, %c0_4] : memref<1x32xf32, #tpu.memory_space<vmem>>, vector<1x32xf32>
    %6 = vector.broadcast %5 : vector<1x32xf32> to vector<8x32xf32>
    %7 = arith.addf %4, %6 : vector<8x32xf32>
    %8 = math.sin %7 : vector<8x32xf32>
    %cst = arith.constant dense<0.000000e+00> : vector<8xf32>
    %9 = vector.multi_reduction <add>, %8, %cst [1] : vector<8x32xf32> to vector<8xf32>
    %10 = vector.shape_cast %9 : vector<8xf32> to vector<8x1xf32>
    %cst_5 = arith.constant 3.200000e+01 : f32
    %11 = vector.broadcast %cst_5 : f32 to vector<8x1xf32>
    %12 = arith.divf %10, %11 : vector<8x1xf32>
    %13 = vector.broadcast %12 : vector<8x1xf32> to vector<8x32xf32>
    %14 = arith.subf %8, %13 : vector<8x32xf32>
    %15 = arith.mulf %14, %14 : vector<8x32xf32>
    %cst_6 = arith.constant dense<0.000000e+00> : vector<8xf32>
    %16 = vector.multi_reduction <add>, %15, %cst_6 [1] : vector<8x32xf32> to vector<8xf32>
    %17 = vector.shape_cast %16 : vector<8xf32> to vector<8x1xf32>
    %cst_7 = arith.constant 0.0322580636 : f32
    %18 = vector.broadcast %cst_7 : f32 to vector<8x1xf32>
    %19 = arith.mulf %17, %18 : vector<8x1xf32>
    %cst_8 = arith.constant 9.99999996E-13 : f32
    %20 = vector.broadcast %cst_8 : f32 to vector<8x1xf32>
    %21 = arith.addf %19, %20 : vector<8x1xf32>
    %22 = math.rsqrt %21 : vector<8x1xf32>
    %23 = vector.broadcast %22 : vector<8x1xf32> to vector<8x32xf32>
    %24 = arith.mulf %14, %23 : vector<8x32xf32>
    %c0_9 = arith.constant 0 : index
    %c0_10 = arith.constant 0 : index
    %25 = vector.load %arg4[%c0_9, %c0_10] : memref<32x128xf32, #tpu.memory_space<vmem>>, vector<32x128xf32>
    %cst_11 = arith.constant dense<0.000000e+00> : vector<8x128xf32>
    %26 = tpu.matmul %24, %25, %cst_11 {dimension_numbers = #tpu.dot_dimension_numbers<[1], [0], [0], [1], [0, 0, 1, 1], [], []>} : vector<8x32xf32>, vector<32x128xf32>, vector<8x128xf32> -> vector<8x128xf32>
    %c0_12 = arith.constant 0 : index
    %c0_13 = arith.constant 0 : index
    %27 = vector.load %arg5[%c0_12, %c0_13] : memref<1x128xf32, #tpu.memory_space<vmem>>, vector<1x128xf32>
    %28 = vector.broadcast %27 : vector<1x128xf32> to vector<8x128xf32>
    %29 = arith.addf %26, %28 : vector<8x128xf32>
    %30 = arith.negf %29 : vector<8x128xf32>
    %31 = math.exp %30 : vector<8x128xf32>
    %cst_14 = arith.constant 1.000000e+00 : f32
    %32 = vector.broadcast %cst_14 : f32 to vector<8x128xf32>
    %33 = arith.addf %32, %31 : vector<8x128xf32>
    %34 = arith.divf %32, %33 : vector<8x128xf32>
    %35 = arith.mulf %29, %34 : vector<8x128xf32>
    %c0_15 = arith.constant 0 : index
    %c0_16 = arith.constant 0 : index
    %36 = vector.load %arg6[%c0_15, %c0_16] : memref<128x128xf32, #tpu.memory_space<vmem>>, vector<128x128xf32>
    %cst_17 = arith.constant dense<0.000000e+00> : vector<8x128xf32>
    %37 = tpu.matmul %35, %36, %cst_17 {dimension_numbers = #tpu.dot_dimension_numbers<[1], [0], [0], [1], [0, 0, 1, 1], [], []>} : vector<8x128xf32>, vector<128x128xf32>, vector<8x128xf32> -> vector<8x128xf32>
    %c0_18 = arith.constant 0 : index
    %c0_19 = arith.constant 0 : index
    %38 = vector.load %arg7[%c0_18, %c0_19] : memref<1x128xf32, #tpu.memory_space<vmem>>, vector<1x128xf32>
    %39 = vector.broadcast %38 : vector<1x128xf32> to vector<8x128xf32>
    %40 = arith.addf %37, %39 : vector<8x128xf32>
    %c0_20 = arith.constant 0 : index
    %c0_21 = arith.constant 0 : index
    %41 = vector.load %arg8[%c0_20, %c0_21] : memref<8x128xf32, #tpu.memory_space<vmem>>, vector<8x128xf32>
    tpu.vector_store %arg8[%c0_20, %c0_21], %40 {strides = array<i32>} : memref<8x128xf32, #tpu.memory_space<vmem>>, vector<8x128xf32>,
    return
  }
  func.func @transform_0(%arg0: i32) -> (i32, i32) {
    %c0_i32 = arith.constant 0 : i32
    %c0_i32_0 = arith.constant 0 : i32
    return %arg0, %c0_i32 : i32, i32
  }
  func.func @transform_1(%arg0: i32) -> (i32, i32) {
    %c0_i32 = arith.constant 0 : i32
    %c0_i32_0 = arith.constant 0 : i32
    %c0_i32_1 = arith.constant 0 : i32
    return %c0_i32, %c0_i32_0 : i32, i32
  }
  func.func @transform_2(%arg0: i32) -> (i32, i32) {
    %c0_i32 = arith.constant 0 : i32
    %c0_i32_0 = arith.constant 0 : i32
    %c0_i32_1 = arith.constant 0 : i32
    return %c0_i32, %c0_i32_0 : i32, i32
  }
  func.func @transform_3(%arg0: i32) -> (i32, i32) {
    %c0_i32 = arith.constant 0 : i32
    %c0_i32_0 = arith.constant 0 : i32
    %c0_i32_1 = arith.constant 0 : i32
    return %c0_i32, %c0_i32_0 : i32, i32
  }
  func.func @transform_4(%arg0: i32) -> (i32, i32) {
    %c0_i32 = arith.constant 0 : i32
    %c0_i32_0 = arith.constant 0 : i32
    %c0_i32_1 = arith.constant 0 : i32
    return %c0_i32, %c0_i32_0 : i32, i32
  }
  func.func @transform_5(%arg0: i32) -> (i32, i32) {
    %c0_i32 = arith.constant 0 : i32
    %c0_i32_0 = arith.constant 0 : i32
    %c0_i32_1 = arith.constant 0 : i32
    return %c0_i32, %c0_i32_0 : i32, i32
  }
  func.func @transform_6(%arg0: i32) -> (i32, i32) {
    %c0_i32 = arith.constant 0 : i32
    %c0_i32_0 = arith.constant 0 : i32
    %c0_i32_1 = arith.constant 0 : i32
    return %c0_i32, %c0_i32_0 : i32, i32
  }
  func.func @transform_7(%arg0: i32) -> (i32, i32) {
    %c0_i32 = arith.constant 0 : i32
    %c0_i32_0 = arith.constant 0 : i32
    return %arg0, %c0_i32 : i32, i32
  }
}

</mosaic_0001>

<llo_original>
// kernel: tpu_custom_call.1
$region0: #{tpu_custom_call.1}
  #allocation0 [shape = 'u32[]', space=smem, size = 0x4, offset = 0x4, fixed_abs, tag = 'smem constant byte address 0x4 - core index']
  #allocation1 [shape = 'u32[144,128]{1,0:T(1,128)}', space=vmem, size = 0x12000, scoped, tag = 'internal scratch']
  %s0 = inlined_call_operand.hbm [shape: f32[8,1], index: 0, kind: input, shape index: {}]
  %s1 = inlined_call_operand.hbm [shape: f32[1,32], index: 1, kind: input, shape index: {}]
  %s2 = inlined_call_operand.hbm [shape: f32[1,32], index: 2, kind: input, shape index: {}]
  %s3 = inlined_call_operand.hbm [shape: f32[32,128], index: 3, kind: input, shape index: {}]
  %s4 = inlined_call_operand.hbm [shape: f32[1,128], index: 4, kind: input, shape index: {}]
  %s5 = inlined_call_operand.hbm [shape: f32[128,128], index: 5, kind: input, shape index: {}]
  %s6 = inlined_call_operand.hbm [shape: f32[1,128], index: 6, kind: input, shape index: {}]
  %s7 = inlined_call_operand.hbm [shape: f32[8,128], index: 7, kind: output, shape index: {}]
  %s8 = sld [smem:[#allocation0]]
  $region66: #{tpu_custom_call.1} parent=0
    _
  %s10 = ssub.s32 1, %s8
  %s11 = scalar_select 0, %s10, %s8
  $region1: #{tpu_custom_call.1} parent=0
    #allocation2 [shape = 'u8[4096]{0}', space=vmem, size = 0x1000, scoped, tag = 'input window, operand 0, single buffered']
    #allocation3 [shape = 's32[1]{0}', space=sflag, size = 0x4, scoped, tag = 'scoped memory for tpu_custom_call.1']
    #allocation4 [shape = 's32[1]{0}', space=sflag, size = 0x4, scoped, tag = 'scoped memory for tpu_custom_call.1']
    #allocation5 [shape = 'u8[512]{0}', space=vmem, size = 0x400, scoped, tag = 'input window, operand 1, single buffered']
    #allocation6 [shape = 's32[1]{0}', space=sflag, size = 0x4, scoped, tag = 'scoped memory for tpu_custom_call.1']
    #allocation7 [shape = 'u8[512]{0}', space=vmem, size = 0x400, scoped, tag = 'input window, operand 2, single buffered']
    #allocation8 [shape = 'u8[16384]{0}', space=vmem, size = 0x4000, scoped, tag = 'input window, operand 3, single buffered']
    #allocation9 [shape = 's32[1]{0}', space=sflag, size = 0x4, scoped, tag = 'scoped memory for tpu_custom_call.1']
    #allocation10 [shape = 'u8[512]{0}', space=vmem, size = 0x400, scoped, tag = 'input window, operand 4, single buffered']
    #allocation11 [shape = 'u8[65536]{0}', space=vmem, size = 0x10000, scoped, tag = 'input window, operand 5, single buffered']
    #allocation12 [shape = 's32[1]{0}', space=sflag, size = 0x4, scoped, tag = 'scoped memory for tpu_custom_call.1']
    #allocation13 [shape = 'u8[512]{0}', space=vmem, size = 0x400, scoped, tag = 'input window, operand 6, single buffered']
    #allocation14 [shape = 'u8[4096]{0}', space=vmem, size = 0x1000, scoped, tag = 'output window, operand 0, single buffered']
    %12 = vsyncpa [#allocation3], 0
    %13 = vsyncpa [#allocation6], 0
    %14 = vsyncpa [#allocation9], 0
    %15 = vsyncpa [#allocation12], 0
    %16 = vsyncpa [#allocation4], 0
    // Predicated region
    $region2: #{tpu_custom_call.1} parent=1 // pred_check
      _
    $region3: #{tpu_custom_call.1} parent=1 // pred_check_branch
      %18 = sbr.rel (0) target = $region5
    $region4: #{tpu_custom_call.1} parent=1 // pred_region
      %s20 = ssub.s32 128, 128
      %21 = vsyncadd [#allocation3], %s20
      %s23 = sshll.u32 [#allocation2], 4
      %s24 = int_to_ptr.vmem [resolvable:$true] %s23
      %26 = dma.hbm_to_vmem [thread:$0]  %s0, 128, %s24, [#allocation3]
    $region5: #{tpu_custom_call.1} parent=1 // pred_fallthru
      _
    // Predicated region
    $region6: #{tpu_custom_call.1} parent=1 // pred_check
      _
    $region7: #{tpu_custom_call.1} parent=1 // pred_check_branch
      %28 = sbr.rel (0) target = $region9
    $region8: #{tpu_custom_call.1} parent=1 // pred_region
      %s30 = ssub.s32 16, 16
      %31 = vsyncadd [#allocation6], %s30
      %s33 = sshll.u32 [#allocation5], 4
      %s34 = int_to_ptr.vmem [resolvable:$true] %s33
      %36 = dma.hbm_to_vmem [thread:$0]  %s1, 16, %s34, [#allocation6]
    $region9: #{tpu_custom_call.1} parent=1 // pred_fallthru
      _
    // Predicated region
    $region10: #{tpu_custom_call.1} parent=1 // pred_check
      _
    $region11: #{tpu_custom_call.1} parent=1 // pred_check_branch
      %38 = sbr.rel (0) target = $region13
    $region12: #{tpu_custom_call.1} parent=1 // pred_region
      %s40 = ssub.s32 16, 16
      %41 = vsyncadd [#allocation6], %s40
      %s43 = sshll.u32 [#allocation7], 4
      %s44 = int_to_ptr.vmem [resolvable:$true] %s43
      %46 = dma.hbm_to_vmem [thread:$0]  %s2, 16, %s44, [#allocation6]
    $region13: #{tpu_custom_call.1} parent=1 // pred_fallthru
      _
    // Predicated region
    $region14: #{tpu_custom_call.1} parent=1 // pred_check
      _
    $region15: #{tpu_custom_call.1} parent=1 // pred_check_branch
      %48 = sbr.rel (0) target = $region17
    $region16: #{tpu_custom_call.1} parent=1 // pred_region
      %s50 = ssub.s32 512, 512
      %51 = vsyncadd [#allocation9], %s50
      %s52 = sshll.u32 [#allocation8], 4
      %s53 = int_to_ptr.vmem [resolvable:$true] %s52
      %58 = dma.hbm_to_vmem [thread:$0]  %s3, 512, %s53, [#allocation9], 128, 128, 8
    $region17: #{tpu_custom_call.1} parent=1 // pred_fallthru
      _
    // Predicated region
    $region18: #{tpu_custom_call.1} parent=1 // pred_check
      _
    $region19: #{tpu_custom_call.1} parent=1 // pred_check_branch
      %60 = sbr.rel (0) target = $region21
    $region20: #{tpu_custom_call.1} parent=1 // pred_region
      %s62 = ssub.s32 16, 16
      %63 = vsyncadd [#allocation9], %s62
      %s65 = sshll.u32 [#allocation10], 4
      %s66 = int_to_ptr.vmem [resolvable:$true] %s65
      %68 = dma.hbm_to_vmem [thread:$0]  %s4, 16, %s66, [#allocation9]
    $region21: #{tpu_custom_call.1} parent=1 // pred_fallthru
      _
    // Predicated region
    $region22: #{tpu_custom_call.1} parent=1 // pred_check
      _
    $region23: #{tpu_custom_call.1} parent=1 // pred_check_branch
      %70 = sbr.rel (0) target = $region25
    $region24: #{tpu_custom_call.1} parent=1 // pred_region
      %s72 = ssub.s32 2048, 2048
      %73 = vsyncadd [#allocation12], %s72
      %s74 = sshll.u32 [#allocation11], 4
      %s75 = int_to_ptr.vmem [resolvable:$true] %s74
      %80 = dma.hbm_to_vmem [thread:$0]  %s5, 2048, %s75, [#allocation12], 128, 128, 8
    $region25: #{tpu_custom_call.1} parent=1 // pred_fallthru
      _
    // Predicated region
    $region26: #{tpu_custom_call.1} parent=1 // pred_check
      _
    $region27: #{tpu_custom_call.1} parent=1 // pred_check_branch
      %82 = sbr.rel (0) target = $region29
    $region28: #{tpu_custom_call.1} parent=1 // pred_region
      %s84 = ssub.s32 16, 16
      %85 = vsyncadd [#allocation12], %s84
      %s87 = sshll.u32 [#allocation13], 4
      %s88 = int_to_ptr.vmem [resolvable:$true] %s87
      %90 = dma.hbm_to_vmem [thread:$0]  %s6, 16, %s88, [#allocation12]
    $region29: #{tpu_custom_call.1} parent=1 // pred_fallthru
      _
    // Predicated region
    $region30: #{tpu_custom_call.1} parent=1 // pred_check
      _
    $region31: #{tpu_custom_call.1} parent=1 // pred_check_branch
      %92 = sbr.rel (0) target = $region33
    $region32: #{tpu_custom_call.1} parent=1 // pred_region
      %93 = dma.done [#allocation3], 128
    $region33: #{tpu_custom_call.1} parent=1 // pred_fallthru
      _
    // Predicated region
    $region34: #{tpu_custom_call.1} parent=1 // pred_check
      _
    $region35: #{tpu_custom_call.1} parent=1 // pred_check_branch
      %95 = sbr.rel (0) target = $region37
    $region36: #{tpu_custom_call.1} parent=1 // pred_region
      %96 = dma.done [#allocation6], 16
    $region37: #{tpu_custom_call.1} parent=1 // pred_fallthru
      _
    // Predicated region
    $region38: #{tpu_custom_call.1} parent=1 // pred_check
      _
    $region39: #{tpu_custom_call.1} parent=1 // pred_check_branch
      %98 = sbr.rel (0) target = $region41
    $region40: #{tpu_custom_call.1} parent=1 // pred_region
      %99 = dma.done [#allocation6], 16
    $region41: #{tpu_custom_call.1} parent=1 // pred_fallthru
      _
    // Predicated region
    $region42: #{tpu_custom_call.1} parent=1 // pred_check
      _
    $region43: #{tpu_custom_call.1} parent=1 // pred_check_branch
      %101 = sbr.rel (0) target = $region45
    $region44: #{tpu_custom_call.1} parent=1 // pred_region
      %102 = dma.done [#allocation9], 512
    $region45: #{tpu_custom_call.1} parent=1 // pred_fallthru
      _
    // Predicated region
    $region46: #{tpu_custom_call.1} parent=1 // pred_check
      _
    $region47: #{tpu_custom_call.1} parent=1 // pred_check_branch
      %104 = sbr.rel (0) target = $region49
    $region48: #{tpu_custom_call.1} parent=1 // pred_region
      %105 = dma.done [#allocation9], 16
    $region49: #{tpu_custom_call.1} parent=1 // pred_fallthru
      _
    // Predicated region
    $region50: #{tpu_custom_call.1} parent=1 // pred_check
      _
    $region51: #{tpu_custom_call.1} parent=1 // pred_check_branch
      %107 = sbr.rel (0) target = $region53
    $region52: #{tpu_custom_call.1} parent=1 // pred_region
      %108 = dma.done [#allocation12], 2048
    $region53: #{tpu_custom_call.1} parent=1 // pred_fallthru
      _
    // Predicated region
    $region54: #{tpu_custom_call.1} parent=1 // pred_check
      _
    $region55: #{tpu_custom_call.1} parent=1 // pred_check_branch
      %110 = sbr.rel (0) target = $region57
    $region56: #{tpu_custom_call.1} parent=1 // pred_region
      %111 = dma.done [#allocation12], 16
    $region57: #{tpu_custom_call.1} parent=1 // pred_fallthru
      _
    %v112 = vld [vmem:[#allocation2] sm:$0xff]
    %v113 = vld [vmem:[#allocation5] sm:$0x1]
    %115 = vset.pattern.permute.xlu0 0
    %116 = vperm.xlu0 %115, %v112
    %v117 = vpop.permute.xlu0 %116
    %v120 = vlaneseq
    %v121 = vshrl.u32 %v120, 7
    %v122 = vsub.s32 0, %v121
    %v123 = vrot.slane %v113, %v122
    %v125 = vmul.f32 %v117, %v123
    %v126 = vld [vmem:[#allocation7] sm:$0x1]
    %v128 = vlaneseq
    %v129 = vshrl.u32 %v128, 7
    %v130 = vsub.s32 0, %v129
    %v131 = vrot.slane %v126, %v130
    %v133 = vadd.f32 %v125, %v131
    %v134 = vand.u32 2147483647, %v133
    %vm135 = vcmp.le.f32.partialorder %v134, 0.7853982
    %vm136 = vcmp.lt.s32.totalorder %v133, 0
    %v137 = vand.u32 %v133, 2139095040
    %v138 = vshrl.u32 %v137, 23
    %v139 = vsub.s32 %v138, 127
    %v140 = vand.u32 2147483647, %v133
    %v141 = vand.u32 %v140, 8388607
    %v142 = vor.u32 %v141, 8388608
    %v143 = vsub.s32 0, %v142
    %v144 = vadd.s32 %v139, 1
    %vm145 = vcmp.gt.s32.totalorder %v144, 0
    %v146 = vsel %vm145, %v144, 0
    %v147 = vshrl.u32 %v146, 5
    %v148 = vand.u32 %v146, 31
    %v149 = vsub.s32 32, %v148
    %v150 = vshrl.u32 683565275, %v149
    %v151 = vshll.u32 683565275, %v148
    %v152 = vshrl.u32 2475754826, %v149
    %v153 = vor.u32 %v151, %v152
    %v154 = vshll.u32 2475754826, %v148
    %v155 = vshrl.u32 2131351028, %v149
    %v156 = vor.u32 %v154, %v155
    %v157 = vshll.u32 2131351028, %v148
    %v158 = vshrl.u32 2102212464, %v149
    %v159 = vor.u32 %v157, %v158
    %v160 = vshll.u32 2102212464, %v148
    %v161 = vshrl.u32 920167782, %v149
    %v162 = vor.u32 %v160, %v161
    %v163 = vshll.u32 920167782, %v148
    %v164 = vshrl.u32 1326507024, %v149
    %v165 = vor.u32 %v163, %v164
    %vm166 = vcmp.lt.s32.totalorder %v147, 1
    %vm167 = vcmp.lt.s32.totalorder %v147, 2
    %vm168 = vcmp.lt.s32.totalorder %v147, 3
    %vm169 = vcmp.lt.s32.totalorder %v147, 4
    %v170 = vsel %vm166, %v150, %v153
    %v171 = vsel %vm169, %v159, 2102212464
    %v172 = vsel %vm168, %v156, %v171
    %v173 = vsel %vm167, %v170, %v172
    %v174 = vsel %vm166, %v153, %v156
    %v175 = vsel %vm169, %v162, 920167782
    %v176 = vsel %vm168, %v159, %v175
    %v177 = vsel %vm167, %v174, %v176
    %v178 = vsel %vm166, %v156, %v159
    %v179 = vsel %vm169, %v165, 1326507024
    %v180 = vsel %vm168, %v162, %v179
    %v181 = vsel %vm167, %v178, %v180
    %v182 = vshll.u32 %v142, 8
    %v183 = vmul.u32.u64.compose %v182, %v181
    %v184 = vextract.low.u32 %v183
    %v185 = vextract.high.u32 %v183
    %v186 = vmul.u32.u64.compose %v182, %v177
    %v187 = vextract.low.u32 %v186
    %v188 = vextract.high.u32 %v186
    %v189 = vmul.u32 %v182, %v173
    %v190 = vadd.s32 %v185, %v187
    %vm191 = vc.u32 %v185, %v187
    %v192 = vadd.s32 %v188, 1
    %v193 = vsel %vm191, %v192, %v188
    %v194 = vadd.s32 %v189, %v193
    %v195 = vadd.s32 %v194, 536870912
    %v196 = vshrl.u32 %v195, 30
    %v197 = vshll.u32 %v196, 30
    %v198 = vsub.s32 %v194, %v197
    %vm199 = vcmp.lt.s32.totalorder %v198, 0
    %v200 = vsub.s32 0, %v198
    %v201 = vsel %vm199, %v200, %v198
    %v202 = vclz %v201
    %v203 = vsub.s32 %v202, 2
    %vm204 = vcmp.gt.s32.totalorder 0, %v203
    %v205 = vsel %vm204, 0, %v203
    %v206 = vsub.s32 32, %v205
    %v207 = vshll.u32 %v198, %v205
    %v208 = vshrl.u32 %v190, %v206
    %v209 = vor.u32 %v207, %v208
    %v210 = vsub.s32 4294967266, %v205
    %v211 = vadd.s32 %v210, 127
    %v212 = vshll.u32 %v211, 23
    %v213 = vor.u32 4788187, %v212
    %v214 = vand.u32 2147483647, %v213
    %v216 = vcvt.s32.f32 %v209
    %v217 = vmul.f32 %v216, %v214
    %v218 = vxor.u32 %v217, 2147483648
    %v219 = vsel %vm136, %v218, %v217
    %v220 = vsub.s32 4, %v196
    %v221 = vsel %vm136, %v220, %v196
    %v222 = vsel %vm135, %v133, %v219
    %v223 = vsel %vm135, 0, %v221
    %v224 = vcosq.f32.pop %v222
    %v225 = vsinq.f32.pop %v222
    %vm226 = vweird.f32 %v133
    %v227 = vadd.s32 %v223, 3
    %v228 = vand.u32 %v227, 3
    %vm229 = vcmp.lt.s32.totalorder %v228, 2
    %vm230 = vcmp.eq.s32.totalorder %v228, 0
    %v231 = vxor.u32 %v225, 2147483648
    %v232 = vsel %vm230, %v224, %v231
    %vm233 = vcmp.eq.s32.totalorder %v228, 2
    %v234 = vxor.u32 %v224, 2147483648
    %v235 = vsel %vm233, %v234, %v225
    %v236 = vsel %vm229, %v232, %v235
    %v237 = vsel %vm226, nan, %v236
    %vm238 = vcmask 261120
    %v239 = vsel %vm238, %v237, 0.0
    %240 = vadd.xlane.f32.xlu0 %v239
    %v241 = vpop.xlane.xlu0 %240
    %v242 = vrcp.pop 32.0
    %v243 = vmul.f32 %v241, %v242
    %v244 = vsub.f32 %v237, %v243
    %v245 = vmul.f32 %v244, %v244
    %v246 = vsel %vm238, %v245, 0.0
    %247 = vadd.xlane.f32.xlu0 %v246
    %v248 = vpop.xlane.xlu0 %247
    %v249 = vmul.f32 %v248, 0.032258064
    %v250 = vadd.f32 %v249, 1e-12
    %v251 = vrsqrt.pop %v250
    %v252 = vmul.f32 %v244, %v251
    %v253 = vld [vmem:[#allocation8] sm:$0xff]
    %v254 = vld [vmem:[#allocation8 + $0x8] sm:$0xff]
    %v255 = vld [vmem:[#allocation8 + $0x10] sm:$0xff]
    %v256 = vld [vmem:[#allocation8 + $0x18] sm:$0xff]
    %v257 = vld [vmem:[#allocation10] sm:$0x1]
    %v259 = vlaneseq
    %v260 = vshrl.u32 %v259, 7
    %v261 = vsub.s32 0, %v260
    %v262 = vrot.slane %v257, %v261
    %v265 = vsel %vm238, %v252, 0
    %267 = vmatprep.subr.mxu0 0.0
    %268 = vmatpush1.msra.mxu0 %v253
    %269 = vmatprep.subr.mxu0 0.0
    %270 = vmatpush1.msra.mxu0 %v254
    %271 = vmatprep.subr.mxu0 0.0
    %272 = vmatpush1.msra.mxu0 %v255
    %273 = vmatprep.subr.mxu0 0.0
    %274 = vmatpush1.msra.mxu0 %v256
    %275 = vmatprep.subr.mxu0 0.0
    %276 = vmatpush1.msra.mxu0 0.0
    %277 = vmatprep.subr.mxu0 0.0
    %278 = vmatpush1.msra.mxu0 0.0
    %279 = vmatprep.subr.mxu0 0.0
    %280 = vmatpush1.msra.mxu0 0.0
    %281 = vmatprep.subr.mxu0 0.0
    %282 = vmatpush1.msra.mxu0 0.0
    %283 = vmatprep.subr.mxu0 0.0
    %284 = vmatpush1.msra.mxu0 0.0
    %285 = vmatprep.subr.mxu0 0.0
    %286 = vmatpush1.msra.mxu0 0.0
    %287 = vmatprep.subr.mxu0 0.0
    %288 = vmatpush1.msra.mxu0 0.0
    %289 = vmatprep.subr.mxu0 0.0
    %290 = vmatpush1.msra.mxu0 0.0
    %291 = vmatprep.subr.mxu0 0.0
    %292 = vmatpush1.msra.mxu0 0.0
    %293 = vmatprep.subr.mxu0 0.0
    %294 = vmatpush1.msra.mxu0 0.0
    %295 = vmatprep.subr.mxu0 0.0
    %296 = vmatpush1.msra.mxu0 0.0
    %297 = vmatprep.subr.mxu0 0.0
    %298 = vmatpush1.msra.mxu0 0.0
    %299 = vmatprep.subr.mxu0 0.0
    %300 = vmatpush1.msra.mxu0 0.0
    %301 = vmatprep.subr.mxu0 0.0
    %302 = vmatpush1.msra.mxu0 0.0
    %303 = vmatprep.subr.mxu0 0.0
    %304 = vmatpush1.msra.mxu0 0.0
    %305 = vmatprep.subr.mxu0 0.0
    %306 = vmatpush1.msra.mxu0 0.0
    %307 = vmatprep.subr.mxu0 0.0
    %308 = vmatpush1.msra.mxu0 0.0
    %309 = vmatprep.subr.mxu0 0.0
    %310 = vmatpush1.msra.mxu0 0.0
    %311 = vmatprep.subr.mxu0 0.0
    %312 = vmatpush1.msra.mxu0 0.0
    %313 = vmatprep.subr.mxu0 0.0
    %314 = vmatpush1.msra.mxu0 0.0
    %315 = vmatprep.subr.mxu0 0.0
    %316 = vmatpush1.msra.mxu0 0.0
    %317 = vmatprep.subr.mxu0 0.0
    %318 = vmatpush1.msra.mxu0 0.0
    %319 = vmatprep.subr.mxu0 0.0
    %320 = vmatpush1.msra.mxu0 0.0
    %321 = vmatprep.subr.mxu0 0.0
    %322 = vmatpush1.msra.mxu0 0.0
    %323 = vmatprep.subr.mxu0 0.0
    %324 = vmatpush1.msra.mxu0 0.0
    %325 = vmatprep.subr.mxu0 0.0
    %326 = vmatpush1.msra.mxu0 0.0
    %327 = vmatprep.subr.mxu0 0.0
    %328 = vmatpush1.msra.mxu0 0.0
    %329 = vmatprep.subr.mxu0 0.0
    %330 = vmatpush1.msra.mxu0 0.0
    %331 = vmatprep.mubr.f32.mxu0 0.0
    %332 = vmatmul.mubr.f32.gmra.mrb[0].mxu0 %v265
    %v333 = vpop.f32.mrb[0].mxu0
    %v334 = vadd.f32 %v262, %v333
    %v335 = vpop.f32.mrb[0].mxu0
    %336 = vdwg.mxu0
    %v337 = vxor.u32 %v334, 2147483648
    %v338 = vmul.f32 %v337, 1.442695
    %v339 = vpow.pop %v338
    %v340 = vadd.f32 %v339, 1.0
    %v341 = vrcp.pop %v340
    %v342 = vmul.f32 1.0, %v341
    %v343 = vmul.f32 %v334, %v342
    %v344 = vld [vmem:[#allocation11] sm:$0xff]
    %v345 = vld [vmem:[#allocation11 + $0x8] sm:$0xff]
    %v346 = vld [vmem:[#allocation11 + $0x10] sm:$0xff]
    %v347 = vld [vmem:[#allocation11 + $0x18] sm:$0xff]
    %v348 = vld [vmem:[#allocation11 + $0x20] sm:$0xff]
    %v349 = vld [vmem:[#allocation11 + $0x28] sm:$0xff]
    %v350 = vld [vmem:[#allocation11 + $0x30] sm:$0xff]
    %v351 = vld [vmem:[#allocation11 + $0x38] sm:$0xff]
    %v352 = vld [vmem:[#allocation11 + $0x40] sm:$0xff]
    %v353 = vld [vmem:[#allocation11 + $0x48] sm:$0xff]
    %v354 = vld [vmem:[#allocation11 + $0x50] sm:$0xff]
    %v355 = vld [vmem:[#allocation11 + $0x58] sm:$0xff]
    %v356 = vld [vmem:[#allocation11 + $0x60] sm:$0xff]
    %v357 = vld [vmem:[#allocation11 + $0x68] sm:$0xff]
    %v358 = vld [vmem:[#allocation11 + $0x70] sm:$0xff]
    %v359 = vld [vmem:[#allocation11 + $0x78] sm:$0xff]
    %v360 = vld [vmem:[#allocation13] sm:$0x1]
    %v362 = vlaneseq
    %v363 = vshrl.u32 %v362, 7
    %v364 = vsub.s32 0, %v363
    %v365 = vrot.slane %v360, %v364
    %367 = vmatprep.subr.mxu0 0.0
    %368 = vmatpush1.msra.mxu0 %v344
    %369 = vmatprep.subr.mxu0 0.0
    %370 = vmatpush1.msra.mxu0 %v345
    %371 = vmatprep.subr.mxu0 0.0
    %372 = vmatpush1.msra.mxu0 %v346
    %373 = vmatprep.subr.mxu0 0.0
    %374 = vmatpush1.msra.mxu0 %v347
    %375 = vmatprep.subr.mxu0 0.0
    %376 = vmatpush1.msra.mxu0 %v348
    %377 = vmatprep.subr.mxu0 0.0
    %378 = vmatpush1.msra.mxu0 %v349
    %379 = vmatprep.subr.mxu0 0.0
    %380 = vmatpush1.msra.mxu0 %v350
    %381 = vmatprep.subr.mxu0 0.0
    %382 = vmatpush1.msra.mxu0 %v351
    %383 = vmatprep.subr.mxu0 0.0
    %384 = vmatpush1.msra.mxu0 %v352
    %385 = vmatprep.subr.mxu0 0.0
    %386 = vmatpush1.msra.mxu0 %v353
    %387 = vmatprep.subr.mxu0 0.0
    %388 = vmatpush1.msra.mxu0 %v354
    %389 = vmatprep.subr.mxu0 0.0
    %390 = vmatpush1.msra.mxu0 %v355
    %391 = vmatprep.subr.mxu0 0.0
    %392 = vmatpush1.msra.mxu0 %v356
    %393 = vmatprep.subr.mxu0 0.0
    %394 = vmatpush1.msra.mxu0 %v357
    %395 = vmatprep.subr.mxu0 0.0
    %396 = vmatpush1.msra.mxu0 %v358
    %397 = vmatprep.subr.mxu0 0.0
    %398 = vmatpush1.msra.mxu0 %v359
    %399 = vmatprep.subr.mxu0 0.0
    %400 = vmatpush1.msra.mxu0 0.0
    %401 = vmatprep.subr.mxu0 0.0
    %402 = vmatpush1.msra.mxu0 0.0
    %403 = vmatprep.subr.mxu0 0.0
    %404 = vmatpush1.msra.mxu0 0.0
    %405 = vmatprep.subr.mxu0 0.0
    %406 = vmatpush1.msra.mxu0 0.0
    %407 = vmatprep.subr.mxu0 0.0
    %408 = vmatpush1.msra.mxu0 0.0
    %409 = vmatprep.subr.mxu0 0.0
    %410 = vmatpush1.msra.mxu0 0.0
    %411 = vmatprep.subr.mxu0 0.0
    %412 = vmatpush1.msra.mxu0 0.0
    %413 = vmatprep.subr.mxu0 0.0
    %414 = vmatpush1.msra.mxu0 0.0
    %415 = vmatprep.subr.mxu0 0.0
    %416 = vmatpush1.msra.mxu0 0.0
    %417 = vmatprep.subr.mxu0 0.0
    %418 = vmatpush1.msra.mxu0 0.0
    %419 = vmatprep.subr.mxu0 0.0
    %420 = vmatpush1.msra.mxu0 0.0
    %421 = vmatprep.subr.mxu0 0.0
    %422 = vmatpush1.msra.mxu0 0.0
    %423 = vmatprep.subr.mxu0 0.0
    %424 = vmatpush1.msra.mxu0 0.0
    %425 = vmatprep.subr.mxu0 0.0
    %426 = vmatpush1.msra.mxu0 0.0
    %427 = vmatprep.subr.mxu0 0.0
    %428 = vmatpush1.msra.mxu0 0.0
    %429 = vmatprep.subr.mxu0 0.0
    %430 = vmatpush1.msra.mxu0 0.0
    %431 = vmatprep.mubr.f32.mxu0 0.0
    %432 = vmatmul.mubr.f32.gmra.mrb[0].mxu0 %v343
    %v433 = vpop.f32.mrb[0].mxu0
    %v434 = vadd.f32 %v365, %v433
    %v435 = vpop.f32.mrb[0].mxu0
    %436 = vdwg.mxu0
    %437 = vst [vmem:[#allocation14] sm:$0xff] %v434
    // Predicated region
    $region58: #{tpu_custom_call.1} parent=1 // pred_check
      _
    $region59: #{tpu_custom_call.1} parent=1 // pred_check_branch
      %439 = sbr.rel (0) target = $region61
    $region60: #{tpu_custom_call.1} parent=1 // pred_region
      %s441 = ssub.s32 128, 128
      %442 = vsyncadd [#allocation4], %s441
      %s444 = sshll.u32 [#allocation14], 4
      %s445 = int_to_ptr.vmem [resolvable:$true] %s444
      %447 = dma.vmem_to_hbm [thread:$0]  %s445, 128, %s7, [#allocation4]
    $region61: #{tpu_custom_call.1} parent=1 // pred_fallthru
      _
    // Predicated region
    $region62: #{tpu_custom_call.1} parent=1 // pred_check
      _
    $region63: #{tpu_custom_call.1} parent=1 // pred_check_branch
      %449 = sbr.rel (0) target = $region65
    $region64: #{tpu_custom_call.1} parent=1 // pred_region
      %450 = dma.done [#allocation4], 128
    $region65: #{tpu_custom_call.1} parent=1 // pred_fallthru
      _
    %451 = vsyncpa [#allocation3], 1
    %452 = vsyncpa [#allocation6], 1
    %453 = vsyncpa [#allocation9], 1
    %454 = vsyncpa [#allocation12], 1
    %455 = vsyncpa [#allocation4], 1

</llo_original>
